<compile_context>
chip_gen: v6e
topology: v6e:2x2x1
jax: 0.10.0
libtpu: 0.0.40
codegen_flags: <defaults>
</compile_context>

<pallas_src>
import functools

import jax
import jax.numpy as jnp
from jax import lax
from jax.experimental import pallas as pl
from jax.experimental.pallas import tpu as pltpu


def _build_patches(xp, H, W, K, Cin):
    """im2col: (H+2p, W+2p, Cin) padded image -> (H*W, K*K*Cin) patch matrix."""
    taps = []
    for ky in range(K):
        for kx in range(K):
            taps.append(xp[ky:ky + H, kx:kx + W, :].reshape(H * W, Cin))
    return jnp.concatenate(taps, axis=-1)


# --------------------------- fused Conv + BN + LeakyReLU kernel ----------------------
def _cbl_kernel(x_ref, w_ref, shift_ref, o_ref, *scratch, H, W, K, Cin,
                negative_slope, use_im2col, cache_patches):
    """One (image, Cout-block) step: Conv(KxK,'same',stride 1) + folded BN + LeakyReLU.

    x_ref:     (1, H+2p, W+2p, Cin)  zero-padded activations (compute dtype, NHWC)
    w_ref:     (tco, K*K*Cin)        BN-scale-folded conv weight (compute dtype)
    shift_ref: (tco, 1)              folded BN shift (f32)
    o_ref:     (1, tco, H*W)         output block, NCHW-flat (f32), lane-dense stores
    scratch:   optional (H*W, K*K*Cin) VMEM patch cache (reused across Cout blocks)
    """
    HW = H * W

    if use_im2col:
        # ---- merged K*K taps -> single MXU contraction of size K*K*Cin ----
        if cache_patches:
            patch_ref = scratch[0]

            @pl.when(pl.program_id(1) == 0)          # rebuild only when image changes
            def _():
                patch_ref[...] = _build_patches(x_ref[0], H, W, K, Cin)

            patches = patch_ref[...]
        else:
            patches = _build_patches(x_ref[0], H, W, K, Cin)

        # contract-last-with-last: (tco, KKC) . (HW, KKC)^T -> (tco, HW), f32 acc
        acc = lax.dot_general(
            w_ref[...], patches,
            dimension_numbers=(((1,), (1,)), ((), ())),
            preferred_element_type=jnp.float32)
    else:
        # ---- large Cin: per-tap accumulation, no K*K-sized patch matrix in VMEM ----
        xp = x_ref[0]
        acc = jnp.zeros((w_ref.shape[0], HW), jnp.float32)
        for ky in range(K):
            for kx in range(K):
                tap = xp[ky:ky + H, kx:kx + W, :].reshape(HW, Cin)
                wk = w_ref[:, (ky * K + kx) * Cin:(ky * K + kx + 1) * Cin]
                acc = acc + lax.dot_general(
                    wk, tap,
                    dimension_numbers=(((1,), (1,)), ((), ())),
                    preferred_element_type=jnp.float32)

    # ---- folded BatchNorm shift (scale already in the weights) + LeakyReLU(0.1) ----
    y = acc + shift_ref[...]
    y = jnp.where(y > 0, y, negative_slope * y)
    o_ref[0] = y.astype(o_ref.dtype)                  # lane-dense (tco, H*W) store


def _pick_cout_block(cout, max_block=256):
    """Largest multiple-of-8 divisor of Cout that is <= max_block (or Cout itself)."""
    if cout <= max_block:
        return cout
    for t in range(max_block, 7, -8):
        if cout % t == 0:
            return t
    return cout


# ----------------------------------------- wrapper -----------------------------------
def cbl_forward(x_nchw, conv_w, bn_gamma, bn_beta, bn_mean, bn_var, *,
                stride=1, eps=1e-5, negative_slope=0.1,
                compute_dtype=jnp.bfloat16):
    """CBL forward: LeakyReLU(BN(Conv2d(x)), 0.1). x is NCHW, conv_w is (Cout,Cin,K,K)."""
    if stride != 1:
        raise NotImplementedError("TODO(synk): stride > 1 not implemented")
    N, Cin, H, W = x_nchw.shape
    Cout, Cin_w, K, K2 = conv_w.shape
    assert Cin_w == Cin and K == K2
    if K % 2 != 1:
        raise NotImplementedError(
            "TODO(synk): even kernel_size (PyTorch pad=k//2 gives (H+1)x(W+1)) not implemented")
    p = K // 2
    HW = H * W

    # Fold eval-mode BatchNorm: scale goes into the f32 weights (before the bf16 cast),
    # shift stays as a per-channel f32 bias applied in the kernel epilogue.
    scale = (bn_gamma.astype(jnp.float32) / jnp.sqrt(bn_var.astype(jnp.float32) + eps))
    shift = bn_beta.astype(jnp.float32) - bn_mean.astype(jnp.float32) * scale
    w_folded = conv_w.astype(jnp.float32) * scale[:, None, None, None]
    # Weight -> (Cout, K*K*Cin), ordered (ky, kx, cin) to match the patch columns.
    w2d = jnp.transpose(w_folded, (0, 2, 3, 1)).reshape(Cout, K * K * Cin)
    w2d = w2d.astype(compute_dtype)

    # bf16 channels-last activations, zero halo added ONCE here (not per grid step).
    x_nhwc = jnp.transpose(x_nchw, (0, 2, 3, 1)).astype(compute_dtype)
    x_pad = jnp.pad(x_nhwc, ((0, 0), (p, p), (p, p), (0, 0)))
    Hp, Wp = H + 2 * p, W + 2 * p

    tco = _pick_cout_block(Cout)
    n_co = Cout // tco
    use_im2col = Cin < 256                       # big Cin -> per-tap MXU accumulation
    cache_patches = use_im2col and n_co > 1      # reuse patch matrix across Cout blocks

    kern = functools.partial(_cbl_kernel, H=H, W=W, K=K, Cin=Cin,
                             negative_slope=negative_slope,
                             use_im2col=use_im2col, cache_patches=cache_patches)

    scratch_shapes = ([pltpu.VMEM((HW, K * K * Cin), compute_dtype)]
                      if cache_patches else [])

    out_flat = pl.pallas_call(
        kern,
        out_shape=jax.ShapeDtypeStruct((N, Cout, HW), jnp.float32),
        grid=(N, n_co),
        in_specs=[
            # x block index depends only on n -> re-DMA'd once per image, reused
            # across all Cout blocks.
            pl.BlockSpec((1, Hp, Wp, Cin), lambda n, co: (n, 0, 0, 0)),
            pl.BlockSpec((tco, K * K * Cin), lambda n, co: (co, 0)),
            pl.BlockSpec((tco, 1), lambda n, co: (co, 0)),
        ],
        out_specs=pl.BlockSpec((1, tco, HW), lambda n, co: (n, co, 0)),
        scratch_shapes=scratch_shapes,
        compiler_params=pltpu.CompilerParams(
            dimension_semantics=("parallel", "arbitrary"),
            # TODO(synk): tune per generation once H-strip tiling exists
            # (<=~48 MiB on v7x, up to ~64-100 MiB on v5e/v6e).
            vmem_limit_bytes=32 * 1024 * 1024),
    )(x_pad, w2d, shift.reshape(Cout, 1))

    return out_flat.reshape(N, Cout, H, W)       # free reshape: already NCHW order


# ------------------------------ pure-JAX reference (for check) -----------------------
def _cbl_reference(x, w, gamma, beta, mean, var, *, eps=1e-5, negative_slope=0.1,
                   compute_dtype=jnp.bfloat16):
    # Mirror the kernel's numerics: BN scale folded into f32 weights, then bf16
    # operands (x and folded w), f32 accumulation, f32 shift + LeakyReLU epilogue.
    scale = gamma / jnp.sqrt(var + eps)
    shift = beta - mean * scale
    wq = (w * scale[:, None, None, None]).astype(compute_dtype).astype(jnp.float32)
    xq = x.astype(compute_dtype).astype(jnp.float32)
    y = lax.conv_general_dilated(
        xq, wq, window_strides=(1, 1), padding="SAME",
        dimension_numbers=("NCHW", "OIHW", "NCHW"),
        precision=lax.Precision.HIGHEST)
    y = y + shift[None, :, None, None]
    return jnp.where(y > 0, y, negative_slope * y)


if __name__ == "__main__":
    key = jax.random.PRNGKey(0)
    kx, kw, kg, kb, km, kv = jax.random.split(key, 6)

    N, Cin, H, W = 2, 4, 16, 16      # small demo shapes (NCHW, like PyTorch)
    Cout, K = 32, 3                  # CBL(4, 32, kernel_size=3)

    x = jax.random.normal(kx, (N, Cin, H, W), jnp.float32)
    conv_w = 0.3 * jax.random.normal(kw, (Cout, Cin, K, K), jnp.float32)
    gamma = 1.0 + 0.1 * jax.random.normal(kg, (Cout,), jnp.float32)
    beta = 0.1 * jax.random.normal(kb, (Cout,), jnp.float32)
    mean = 0.1 * jax.random.normal(km, (Cout,), jnp.float32)
    var = 0.5 + 0.5 * jax.random.uniform(kv, (Cout,), jnp.float32)

    out = jax.jit(cbl_forward)(x, conv_w, gamma, beta, mean, var)
    out = jax.block_until_ready(out)
    assert out.shape == (N, Cout, H, W) and out.dtype == jnp.float32

    ref = jax.block_until_ready(_cbl_reference(x, conv_w, gamma, beta, mean, var))
    max_err = float(jnp.max(jnp.abs(out - ref)))
    assert max_err < 2e-3, f"max abs error {max_err}"

    print("KERNEL_OK")
</pallas_src>

<mosaic_0001>
module attributes {stable_mosaic.version = 11 : i64} {
  func.func @_cbl_kernel(%arg0: i32, %arg1: i32, %arg2: memref<1x18x18x4xbf16, #tpu.memory_space<vmem>>, %arg3: memref<32x36xbf16, #tpu.memory_space<vmem>>, %arg4: memref<32x1xf32, #tpu.memory_space<vmem>>, %arg5: memref<1x32x256xf32, #tpu.memory_space<vmem>>) attributes {dimension_semantics = [#tpu.dimension_semantics<parallel>, #tpu.dimension_semantics<arbitrary>], iteration_bounds = array<i64: 2, 1>, scalar_prefetch = 0 : i64, scratch_operands = 0 : i64, tpu.core_type = #tpu.core_type<tc>, window_params = [{transform_indices = @transform_0, window_bounds = array<i64: 1, 18, 18, 4>}, {transform_indices = @transform_1, window_bounds = array<i64: 32, 36>}, {transform_indices = @transform_2, window_bounds = array<i64: 32, 1>}, {transform_indices = @transform_3, window_bounds = array<i64: 1, 32, 256>}]} {
    %c0 = arith.constant 0 : index
    %c0_0 = arith.constant 0 : index
    %c0_1 = arith.constant 0 : index
    %c0_2 = arith.constant 0 : index
    %0 = vector.load %arg2[%c0, %c0_0, %c0_1, %c0_2] : memref<1x18x18x4xbf16, #tpu.memory_space<vmem>>, vector<1x18x18x4xbf16>
    %1 = vector.shape_cast %0 : vector<1x18x18x4xbf16> to vector<18x18x4xbf16>
    %2 = vector.extract_strided_slice %1 {offsets = [0, 0, 0], sizes = [16, 16, 4], strides = [1, 1, 1]} : vector<18x18x4xbf16> to vector<16x16x4xbf16>
    %3 = vector.shape_cast %2 : vector<16x16x4xbf16> to vector<256x4xbf16>
    %4 = vector.extract_strided_slice %1 {offsets = [0, 1, 0], sizes = [16, 16, 4], strides = [1, 1, 1]} : vector<18x18x4xbf16> to vector<16x16x4xbf16>
    %5 = vector.shape_cast %4 : vector<16x16x4xbf16> to vector<256x4xbf16>
    %6 = vector.extract_strided_slice %1 {offsets = [0, 2, 0], sizes = [16, 16, 4], strides = [1, 1, 1]} : vector<18x18x4xbf16> to vector<16x16x4xbf16>
    %7 = vector.shape_cast %6 : vector<16x16x4xbf16> to vector<256x4xbf16>
    %8 = vector.extract_strided_slice %1 {offsets = [1, 0, 0], sizes = [16, 16, 4], strides = [1, 1, 1]} : vector<18x18x4xbf16> to vector<16x16x4xbf16>
    %9 = vector.shape_cast %8 : vector<16x16x4xbf16> to vector<256x4xbf16>
    %10 = vector.extract_strided_slice %1 {offsets = [1, 1, 0], sizes = [16, 16, 4], strides = [1, 1, 1]} : vector<18x18x4xbf16> to vector<16x16x4xbf16>
    %11 = vector.shape_cast %10 : vector<16x16x4xbf16> to vector<256x4xbf16>
    %12 = vector.extract_strided_slice %1 {offsets = [1, 2, 0], sizes = [16, 16, 4], strides = [1, 1, 1]} : vector<18x18x4xbf16> to vector<16x16x4xbf16>
    %13 = vector.shape_cast %12 : vector<16x16x4xbf16> to vector<256x4xbf16>
    %14 = vector.extract_strided_slice %1 {offsets = [2, 0, 0], sizes = [16, 16, 4], strides = [1, 1, 1]} : vector<18x18x4xbf16> to vector<16x16x4xbf16>
    %15 = vector.shape_cast %14 : vector<16x16x4xbf16> to vector<256x4xbf16>
    %16 = vector.extract_strided_slice %1 {offsets = [2, 1, 0], sizes = [16, 16, 4], strides = [1, 1, 1]} : vector<18x18x4xbf16> to vector<16x16x4xbf16>
    %17 = vector.shape_cast %16 : vector<16x16x4xbf16> to vector<256x4xbf16>
    %18 = vector.extract_strided_slice %1 {offsets = [2, 2, 0], sizes = [16, 16, 4], strides = [1, 1, 1]} : vector<18x18x4xbf16> to vector<16x16x4xbf16>
    %19 = vector.shape_cast %18 : vector<16x16x4xbf16> to vector<256x4xbf16>
    %20 = tpu.concatenate %3, %5, %7, %9, %11, %13, %15, %17, %19 in 1 : vector<256x4xbf16>, vector<256x4xbf16>, vector<256x4xbf16>, vector<256x4xbf16>, vector<256x4xbf16>, vector<256x4xbf16>, vector<256x4xbf16>, vector<256x4xbf16>, vector<256x4xbf16> -> vector<256x36xbf16>
    %c0_3 = arith.constant 0 : index
    %c0_4 = arith.constant 0 : index
    %21 = vector.load %arg3[%c0_3, %c0_4] : memref<32x36xbf16, #tpu.memory_space<vmem>>, vector<32x36xbf16>
    %cst = arith.constant dense<0.000000e+00> : vector<32x256xf32>
    %22 = tpu.matmul %21, %20, %cst {dimension_numbers = #tpu.dot_dimension_numbers<[1], [1], [0], [0], [0, 0, 1, 0], [], []>} : vector<32x36xbf16>, vector<256x36xbf16>, vector<32x256xf32> -> vector<32x256xf32>
    %c0_5 = arith.constant 0 : index
    %c0_6 = arith.constant 0 : index
    %23 = vector.load %arg4[%c0_5, %c0_6] : memref<32x1xf32, #tpu.memory_space<vmem>>, vector<32x1xf32>
    %24 = vector.broadcast %23 : vector<32x1xf32> to vector<32x256xf32>
    %25 = arith.addf %22, %24 : vector<32x256xf32>
    %cst_7 = arith.constant 0.000000e+00 : f32
    %26 = vector.broadcast %cst_7 : f32 to vector<32x256xf32>
    %27 = arith.cmpf ogt, %25, %26 : vector<32x256xf32>
    %cst_8 = arith.constant 1.000000e-01 : f32
    %28 = vector.broadcast %cst_8 : f32 to vector<32x256xf32>
    %29 = arith.mulf %28, %25 : vector<32x256xf32>
    %30 = arith.select %27, %25, %29 : vector<32x256xi1>, vector<32x256xf32>
    %c0_9 = arith.constant 0 : index
    %c0_10 = arith.constant 0 : index
    %c0_11 = arith.constant 0 : index
    %31 = vector.load %arg5[%c0_9, %c0_10, %c0_11] : memref<1x32x256xf32, #tpu.memory_space<vmem>>, vector<1x32x256xf32>
    %32 = vector.shape_cast %31 : vector<1x32x256xf32> to vector<32x256xf32>
    %33 = vector.shape_cast %30 : vector<32x256xf32> to vector<1x32x256xf32>
    tpu.vector_store %arg5[%c0_9, %c0_10, %c0_11], %33 {strides = array<i32>} : memref<1x32x256xf32, #tpu.memory_space<vmem>>, vector<1x32x256xf32>,
    return
  }
  func.func @transform_0(%arg0: i32, %arg1: i32) -> (i32, i32, i32, i32) {
    %c0_i32 = arith.constant 0 : i32
    %c0_i32_0 = arith.constant 0 : i32
    %c0_i32_1 = arith.constant 0 : i32
    %c0_i32_2 = arith.constant 0 : i32
    return %arg0, %c0_i32, %c0_i32_0, %c0_i32_1 : i32, i32, i32, i32
  }
  func.func @transform_1(%arg0: i32, %arg1: i32) -> (i32, i32) {
    %c0_i32 = arith.constant 0 : i32
    %c0_i32_0 = arith.constant 0 : i32
    return %arg1, %c0_i32 : i32, i32
  }
  func.func @transform_2(%arg0: i32, %arg1: i32) -> (i32, i32) {
    %c0_i32 = arith.constant 0 : i32
    %c0_i32_0 = arith.constant 0 : i32
    return %arg1, %c0_i32 : i32, i32
  }
  func.func @transform_3(%arg0: i32, %arg1: i32) -> (i32, i32, i32) {
    %c0_i32 = arith.constant 0 : i32
    %c0_i32_0 = arith.constant 0 : i32
    return %arg0, %arg1, %c0_i32 : i32, i32, i32
  }
}

</mosaic_0001>

<llo_original>
// kernel: cbl_forward.1
$region0: #{cbl_forward.1}
  #allocation0 [shape = 'u32[]', space=smem, size = 0x4, offset = 0x4, fixed_abs, tag = 'smem constant byte address 0x4 - core index']
  #allocation1 [shape = 'u32[144,128]{1,0:T(1,128)}', space=vmem, size = 0x12000, scoped, tag = 'internal scratch']
  %s0 = inlined_call_operand.vmem [shape: bf16[2,18,18,4], index: 0, kind: input, shape index: {}]
  %s1 = inlined_call_operand.vmem [shape: bf16[32,36], index: 1, kind: input, shape index: {}]
  %s2 = inlined_call_operand.vmem [shape: f32[32,1], index: 2, kind: input, shape index: {}]
  %s3 = inlined_call_operand.vmem [shape: f32[2,32,256], index: 3, kind: output, shape index: {}]
  %s4 = sld [smem:[#allocation0]]
  $region45: #{cbl_forward.1} parent=0
    _
  %s6 = ssub.s32 1, %s4
  %s7 = scalar_select 0, %s6, %s4
  loop: start=0, step=1, limit=4
  $region2: #{cbl_forward.1} parent=0 // loop_pre_header
    _
  $region3: #{cbl_forward.1} parent=0 // loop_header
    %s9 = sphi 0, %s13
    %p10 = scmp.ge.s32.totalorder %s9, 4
    %s16 = sphi 0, %s28
    %s17 = sphi 0, %s24
    %s18 = sphi 0, %s16
    %s19 = sphi 0, %s17
    %s20 = sphi 0, %s18
    %s21 = sphi 0, %s19
    %s31 = sphi 0, %s33
    %s34 = sphi 0, %s31
    %s35 = sphi 0, %s34
    %s51 = sphi 0, %s35
    %s57 = sphi 0, %s59
    %s60 = sphi 0, %s57
    %s61 = sphi 0, %s60
    %s77 = sphi 0, %s61
    %s83 = sphi 0, %s85
    %s86 = sphi 0, %s83
    %s87 = sphi 0, %s86
    %s103 = sphi 0, %s87
    %s111 = sphi 0, %s113
    %s114 = sphi 0, %s111
    %s115 = sphi 0, %s114
    %s131 = sphi 0, %s115
  $region4: #{cbl_forward.1} parent=0 // loop_header_branch
    %12 = sbr.rel (%p10) target = $region8
  $region5: #{cbl_forward.1} parent=0 // loop_body
    %s14 = ssub.s32 %s9, 1
    %s15 = ssub.s32 %s9, 2
    %s22 = sadd.s32 1, %s17
    %p23 = scmp.ge.s32.totalorder %s22, 1
    %s24 = scalar_select %p23, 0, %s22
    %s25 = sadd.s32 1, %s16
    %s26 = scalar_select %p23, %s25, %s16
    %p27 = scmp.ge.s32.totalorder %s26, 2
    %s28 = scalar_select %p27, 0, %s26
    %s29 = ssub.s32 %s16, %s28
    %p30 = scmp.eq.s32.totalorder %s29, 0
    %s32 = sadd.s32 %s31, 1
    %s33 = scalar_select %p30, %s31, %s32
    %p36 = pneg %p30
    %p37 = scmp.eq.s32.totalorder %s9, 1
    %p38 = por %p36, %p37
    %p39 = scmp.ne.s32.totalorder %s31, %s34
    %p40 = scmp.eq.s32.totalorder %s9, 0
    %p41 = por %p39, %p40
    %p42 = scmp.ne.s32.totalorder %s31, %s34
    %p43 = scmp.eq.s32.totalorder %s14, 1
    %p44 = por %p42, %p43
    %p45 = scmp.ne.s32.totalorder %s34, %s35
    %p46 = scmp.eq.s32.totalorder %s14, 0
    %p47 = por %p45, %p46
    %p48 = scmp.ne.s32.totalorder %s34, %s35
    %p49 = scmp.eq.s32.totalorder %s15, 1
    %p50 = por %p48, %p49
    %p52 = scmp.ne.s32.totalorder %s35, %s51
    %p53 = scmp.eq.s32.totalorder %s15, 0
    %p54 = por %p52, %p53
    %s55 = ssub.s32 %s17, %s24
    %p56 = scmp.eq.s32.totalorder %s55, 0
    %s58 = sadd.s32 %s57, 1
    %s59 = scalar_select %p56, %s57, %s58
    %p62 = pneg %p56
    %p63 = scmp.eq.s32.totalorder %s9, 1
    %p64 = por %p62, %p63
    %p65 = scmp.ne.s32.totalorder %s57, %s60
    %p66 = scmp.eq.s32.totalorder %s9, 0
    %p67 = por %p65, %p66
    %p68 = scmp.ne.s32.totalorder %s57, %s60
    %p69 = scmp.eq.s32.totalorder %s14, 1
    %p70 = por %p68, %p69
    %p71 = scmp.ne.s32.totalorder %s60, %s61
    %p72 = scmp.eq.s32.totalorder %s14, 0
    %p73 = por %p71, %p72
    %p74 = scmp.ne.s32.totalorder %s60, %s61
    %p75 = scmp.eq.s32.totalorder %s15, 1
    %p76 = por %p74, %p75
    %p78 = scmp.ne.s32.totalorder %s61, %s77
    %p79 = scmp.eq.s32.totalorder %s15, 0
    %p80 = por %p78, %p79
    %s81 = ssub.s32 %s17, %s24
    %p82 = scmp.eq.s32.totalorder %s81, 0
    %s84 = sadd.s32 %s83, 1
    %s85 = scalar_select %p82, %s83, %s84
    %p88 = pneg %p82
    %p89 = scmp.eq.s32.totalorder %s9, 1
    %p90 = por %p88, %p89
    %p91 = scmp.ne.s32.totalorder %s83, %s86
    %p92 = scmp.eq.s32.totalorder %s9, 0
    %p93 = por %p91, %p92
    %p94 = scmp.ne.s32.totalorder %s83, %s86
    %p95 = scmp.eq.s32.totalorder %s14, 1
    %p96 = por %p94, %p95
    %p97 = scmp.ne.s32.totalorder %s86, %s87
    %p98 = scmp.eq.s32.totalorder %s14, 0
    %p99 = por %p97, %p98
    %p100 = scmp.ne.s32.totalorder %s86, %s87
    %p101 = scmp.eq.s32.totalorder %s15, 1
    %p102 = por %p100, %p101
    %p104 = scmp.ne.s32.totalorder %s87, %s103
    %p105 = scmp.eq.s32.totalorder %s15, 0
    %p106 = por %p104, %p105
    %s107 = ssub.s32 %s16, %s28
    %s108 = ssub.s32 %s17, %s24
    %s109 = sor.u32 %s107, %s108
    %p110 = scmp.eq.s32.totalorder %s109, 0
    %s112 = sadd.s32 %s111, 1
    %s113 = scalar_select %p110, %s111, %s112
    %p116 = pneg %p110
    %p117 = scmp.eq.s32.totalorder %s9, 1
    %p118 = por %p116, %p117
    %p119 = scmp.ne.s32.totalorder %s111, %s114
    %p120 = scmp.eq.s32.totalorder %s9, 0
    %p121 = por %p119, %p120
    %p122 = scmp.ne.s32.totalorder %s111, %s114
    %p123 = scmp.eq.s32.totalorder %s14, 1
    %p124 = por %p122, %p123
    %p125 = scmp.ne.s32.totalorder %s114, %s115
    %p126 = scmp.eq.s32.totalorder %s14, 0
    %p127 = por %p125, %p126
    %p128 = scmp.ne.s32.totalorder %s114, %s115
    %p129 = scmp.eq.s32.totalorder %s15, 1
    %p130 = por %p128, %p129
    %p132 = scmp.ne.s32.totalorder %s115, %s131
    %p133 = scmp.eq.s32.totalorder %s15, 0
    %p134 = por %p132, %p133
    %p135 = scmp.le.s32.totalorder 1, %s9
    %p136 = scmp.lt.s32.totalorder %s9, 3
    %p137 = pnand %p135, %p136
    %p138 = pneg %p137
    // Predicated region
    $region9: #{cbl_forward.1} parent=5 // pred_check
      _
    $region10: #{cbl_forward.1} parent=5 // pred_check_branch
      %140 = sbr.rel (%p137) target = $region12
    $region11: #{cbl_forward.1} parent=5 // pred_region
      %s141 = ssub.s32 %s9, 1
      // Predicated region
      $region13: #{cbl_forward.1} parent=11 // pred_check
        %p142 = pneg %p73
      $region14: #{cbl_forward.1} parent=11 // pred_check_branch
        %144 = sbr.rel (%p142) target = $region16
      $region15: #{cbl_forward.1} parent=11 // pred_region
        %s145 = smul.u32 4, %s19
        %p146 = scmp.lt.s32.totalorder %s145, 3
        %s147 = scalar_select %p146, %s145, 3
        %s148 = smul.addr %s147, 4
        %s149 = scalar_lea.vmem %s1, %s148
        %s150 = smul.u32 4, %s19
      $region16: #{cbl_forward.1} parent=11 // pred_fallthru
        _
      // Predicated region
      $region17: #{cbl_forward.1} parent=11 // pred_check
        %p151 = pneg %p99
      $region18: #{cbl_forward.1} parent=11 // pred_check_branch
        %153 = sbr.rel (%p151) target = $region20
      $region19: #{cbl_forward.1} parent=11 // pred_region
        %s154 = smul.u32 4, %s19
        %p155 = scmp.lt.s32.totalorder %s154, 3
        %s156 = scalar_select %p155, %s154, 3
        %s157 = smul.addr %s156, 8
        %s158 = scalar_lea.vmem %s2, %s157
        %s159 = smul.u32 4, %s19
      $region20: #{cbl_forward.1} parent=11 // pred_fallthru
        _
    $region12: #{cbl_forward.1} parent=5 // pred_fallthru
      _
    %p160 = scmp.lt.s32.totalorder %s9, 2
    // Predicated region
    $region21: #{cbl_forward.1} parent=5 // pred_check
      %p161 = pneg %p160
    $region22: #{cbl_forward.1} parent=5 // pred_check_branch
      %163 = sbr.rel (%p161) target = $region24
    $region23: #{cbl_forward.1} parent=5 // pred_region
      // Predicated region
      $region25: #{cbl_forward.1} parent=23 // pred_check
        %p164 = pneg %p41
      $region26: #{cbl_forward.1} parent=23 // pred_check_branch
        %166 = sbr.rel (%p164) target = $region28
      $region27: #{cbl_forward.1} parent=23 // pred_region
        %p167 = scmp.lt.s32.totalorder %s16, 1
        %s168 = scalar_select %p167, %s16, 1
        %s169 = smul.addr %s168, 54
        %s170 = smul.addr %s169, 4
        %s171 = scalar_lea.vmem %s0, %s170
      $region28: #{cbl_forward.1} parent=23 // pred_fallthru
        _
    $region24: #{cbl_forward.1} parent=5 // pred_fallthru
      _
    %p172 = scmp.le.s32.totalorder 1, %s9
    %p173 = scmp.lt.s32.totalorder %s9, 3
    %p174 = pnand %p172, %p173
    %p175 = pneg %p174
    // Predicated region
    $region29: #{cbl_forward.1} parent=5 // pred_check
      _
    $region30: #{cbl_forward.1} parent=5 // pred_check_branch
      %177 = sbr.rel (%p174) target = $region32
    $region31: #{cbl_forward.1} parent=5 // pred_region
      %s178 = ssub.s32 %s9, 1
      %p179 = scmp.lt.s32.totalorder %s18, 1
      %s180 = scalar_select %p179, %s18, 1
      %s181 = smul.addr %s180, 54
      %s182 = smul.addr %s181, 4
      %s183 = scalar_lea.vmem %s0, %s182
      %p184 = pneg %p47
      %p185 = pneg %p44
      %s186 = smul.u32 4, %s19
      %p187 = scmp.lt.s32.totalorder %s186, 3
      %s188 = scalar_select %p187, %s186, 3
      %s189 = smul.addr %s188, 4
      %s190 = scalar_lea.vmem %s1, %s189
      %p191 = pneg %p73
      %p192 = pneg %p70
      %s193 = smul.u32 4, %s19
      %p194 = scmp.lt.s32.totalorder %s193, 3
      %s195 = scalar_select %p194, %s193, 3
      %s196 = smul.addr %s195, 8
      %s197 = scalar_lea.vmem %s2, %s196
      %p198 = pneg %p99
      %p199 = pneg %p96
      %p200 = pneg %p127
      %p201 = pneg %p124
      %s202 = smul.u32 4, %s19
      %p203 = scmp.lt.s32.totalorder %s18, 1
      %s204 = scalar_select %p203, %s18, 1
      %p205 = scmp.lt.s32.totalorder %s202, 3
      %s206 = scalar_select %p205, %s202, 3
      %s207 = smul.addr %s206, 2
      %s208 = smul.addr %s204, 8
      %s209 = sadd.s32 %s207, %s208
      %s210 = smul.addr %s209, 8
      %s211 = scalar_lea.vmem %s3, %s210
      %p212 = scmp.lt.s32.totalorder %s18, 1
      %s213 = scalar_select %p212, %s18, 1
      %s214 = smul.addr %s213, 54
      %s215 = smul.addr %s214, 4
      %s216 = scalar_lea.vmem %s0, %s215
      %s217 = smul.u32 4, %s19
      %p218 = scmp.lt.s32.totalorder %s217, 3
      %s219 = scalar_select %p218, %s217, 3
      %s220 = smul.addr %s219, 4
      %s221 = scalar_lea.vmem %s1, %s220
      %s222 = smul.u32 4, %s19
      %s223 = smul.u32 4, %s19
      %p224 = scmp.lt.s32.totalorder %s223, 3
      %s225 = scalar_select %p224, %s223, 3
      %s226 = smul.addr %s225, 8
      %s227 = scalar_lea.vmem %s2, %s226
      %s228 = smul.u32 4, %s19
      %s229 = smul.u32 4, %s19
      %p230 = scmp.lt.s32.totalorder %s18, 1
      %s231 = scalar_select %p230, %s18, 1
      %p232 = scmp.lt.s32.totalorder %s229, 3
      %s233 = scalar_select %p232, %s229, 3
      %s234 = smul.addr %s233, 2
      %s235 = smul.addr %s231, 8
      %s236 = sadd.s32 %s234, %s235
      %s237 = smul.addr %s236, 8
      %s238 = scalar_lea.vmem %s3, %s237
      %s239 = smul.u32 4, %s19
      %v241 = vld [vmem:[%s216] sm:$0xf]
      %v242 = vld [vmem:[%s216 + $0x4] sm:$0xf]
      %v243 = vld [vmem:[%s216 + $0x8] sm:$0x1]
      %v244 = vld [vmem:[%s216 + $0xc] sm:$0xf]
      %v245 = vld [vmem:[%s216 + $0x10] sm:$0xf]
      %v246 = vld [vmem:[%s216 + $0x14] sm:$0x1]
      %v247 = vld [vmem:[%s216 + $0x18] sm:$0xf]
      %v248 = vld [vmem:[%s216 + $0x1c] sm:$0xf]
      %v249 = vld [vmem:[%s216 + $0x20] sm:$0x1]
      %v250 = vld [vmem:[%s216 + $0x24] sm:$0xf]
      %v251 = vld [vmem:[%s216 + $0x28] sm:$0xf]
      %v252 = vld [vmem:[%s216 + $0x2c] sm:$0x1]
      %v253 = vld [vmem:[%s216 + $0x30] sm:$0xf]
      %v254 = vld [vmem:[%s216 + $0x34] sm:$0xf]
      %v255 = vld [vmem:[%s216 + $0x38] sm:$0x1]
      %v256 = vld [vmem:[%s216 + $0x3c] sm:$0xf]
      %v257 = vld [vmem:[%s216 + $0x40] sm:$0xf]
      %v258 = vld [vmem:[%s216 + $0x44] sm:$0x1]
      %v259 = vld [vmem:[%s216 + $0x48] sm:$0xf]
      %v260 = vld [vmem:[%s216 + $0x4c] sm:$0xf]
      %v261 = vld [vmem:[%s216 + $0x50] sm:$0x1]
      %v262 = vld [vmem:[%s216 + $0x54] sm:$0xf]
      %v263 = vld [vmem:[%s216 + $0x58] sm:$0xf]
      %v264 = vld [vmem:[%s216 + $0x5c] sm:$0x1]
      %v265 = vld [vmem:[%s216 + $0x60] sm:$0xf]
      %v266 = vld [vmem:[%s216 + $0x64] sm:$0xf]
      %v267 = vld [vmem:[%s216 + $0x68] sm:$0x1]
      %v268 = vld [vmem:[%s216 + $0x6c] sm:$0xf]
      %v269 = vld [vmem:[%s216 + $0x70] sm:$0xf]
      %v270 = vld [vmem:[%s216 + $0x74] sm:$0x1]
      %v271 = vld [vmem:[%s216 + $0x78] sm:$0xf]
      %v272 = vld [vmem:[%s216 + $0x7c] sm:$0xf]
      %v273 = vld [vmem:[%s216 + $0x80] sm:$0x1]
      %v274 = vld [vmem:[%s216 + $0x84] sm:$0xf]
      %v275 = vld [vmem:[%s216 + $0x88] sm:$0xf]
      %v276 = vld [vmem:[%s216 + $0x8c] sm:$0x1]
      %v277 = vld [vmem:[%s216 + $0x90] sm:$0xf]
      %v278 = vld [vmem:[%s216 + $0x94] sm:$0xf]
      %v279 = vld [vmem:[%s216 + $0x98] sm:$0x1]
      %v280 = vld [vmem:[%s216 + $0x9c] sm:$0xf]
      %v281 = vld [vmem:[%s216 + $0xa0] sm:$0xf]
      %v282 = vld [vmem:[%s216 + $0xa4] sm:$0x1]
      %v283 = vld [vmem:[%s216 + $0xa8] sm:$0xf]
      %v284 = vld [vmem:[%s216 + $0xac] sm:$0xf]
      %v285 = vld [vmem:[%s216 + $0xb0] sm:$0x1]
      %v286 = vld [vmem:[%s216 + $0xb4] sm:$0xf]
      %v287 = vld [vmem:[%s216 + $0xb8] sm:$0xf]
      %v288 = vld [vmem:[%s216 + $0xbc] sm:$0x1]
      %v289 = vld [vmem:[%s216 + $0xc0] sm:$0xf]
      %v290 = vld [vmem:[%s216 + $0xc4] sm:$0xf]
      %v291 = vld [vmem:[%s216 + $0xc8] sm:$0x1]
      %v292 = vld [vmem:[%s216 + $0xcc] sm:$0xf]
      %v293 = vld [vmem:[%s216 + $0xd0] sm:$0xf]
      %v294 = vld [vmem:[%s216 + $0xd4] sm:$0x1]
      %vm295 = vsmask.f32 3328
      %vm296 = vsmask.f32 7440
      %vm297 = vmor %vm295, %vm296
      %v299 = vshrl.u32 %v241, 16
      %v301 = vrot.slane %v299, 4
      %v302 = vshll.u32 %v241, 16
      %v304 = vrot.slane %v302, 5
      %v305 = vor.u32 %v301, %v304
      %v306 = vrot.slane %v305, 4
      %v308 = vshll.u32 %v242, 16
      %v310 = vrot.slane %v308, 5
      %v311 = vsel %vm297, %v306, %v310
      %v312 = vshrl.u32 %v242, 16
      %v314 = vrot.slane %v312, 4
      %v315 = vor.u32 %v314, %v310
      %v316 = vrot.slane %v315, 4
      %v318 = vshll.u32 %v243, 16
      %v320 = vrot.slane %v318, 5
      %v321 = vsel %vm297, %v316, %v320
      %v323 = vshrl.u32 %v244, 16
      %v325 = vrot.slane %v323, 4
      %v326 = vshll.u32 %v244, 16
      %v328 = vrot.slane %v326, 5
      %v329 = vor.u32 %v325, %v328
      %v330 = vrot.slane %v329, 4
      %v332 = vshll.u32 %v245, 16
      %v334 = vrot.slane %v332, 5
      %v335 = vsel %vm297, %v330, %v334
      %v336 = vshrl.u32 %v245, 16
      %v338 = vrot.slane %v336, 4
      %v339 = vor.u32 %v338, %v334
      %v340 = vrot.slane %v339, 4
      %v342 = vshll.u32 %v246, 16
      %v344 = vrot.slane %v342, 5
      %v345 = vsel %vm297, %v340, %v344
      %v347 = vshrl.u32 %v247, 16
      %v349 = vrot.slane %v347, 4
      %v350 = vshll.u32 %v247, 16
      %v352 = vrot.slane %v350, 5
      %v353 = vor.u32 %v349, %v352
      %v354 = vrot.slane %v353, 4
      %v356 = vshll.u32 %v248, 16
      %v358 = vrot.slane %v356, 5
      %v359 = vsel %vm297, %v354, %v358
      %v360 = vshrl.u32 %v248, 16
      %v362 = vrot.slane %v360, 4
      %v363 = vor.u32 %v362, %v358
      %v364 = vrot.slane %v363, 4
      %v366 = vshll.u32 %v249, 16
      %v368 = vrot.slane %v366, 5
      %v369 = vsel %vm297, %v364, %v368
      %v371 = vshrl.u32 %v250, 16
      %v373 = vrot.slane %v371, 4
      %v374 = vshll.u32 %v250, 16
      %v376 = vrot.slane %v374, 5
      %v377 = vor.u32 %v373, %v376
      %v378 = vrot.slane %v377, 4
      %v380 = vshll.u32 %v251, 16
      %v382 = vrot.slane %v380, 5
      %v383 = vsel %vm297, %v378, %v382
      %v384 = vshrl.u32 %v251, 16
      %v386 = vrot.slane %v384, 4
      %v387 = vor.u32 %v386, %v382
      %v388 = vrot.slane %v387, 4
      %v390 = vshll.u32 %v252, 16
      %v392 = vrot.slane %v390, 5
      %v393 = vsel %vm297, %v388, %v392
      %v395 = vshrl.u32 %v253, 16
      %v397 = vrot.slane %v395, 4
      %v398 = vshll.u32 %v253, 16
      %v400 = vrot.slane %v398, 5
      %v401 = vor.u32 %v397, %v400
      %v402 = vrot.slane %v401, 4
      %v404 = vshll.u32 %v254, 16
      %v406 = vrot.slane %v404, 5
      %v407 = vsel %vm297, %v402, %v406
      %v408 = vshrl.u32 %v254, 16
      %v410 = vrot.slane %v408, 4
      %v411 = vor.u32 %v410, %v406
      %v412 = vrot.slane %v411, 4
      %v414 = vshll.u32 %v255, 16
      %v416 = vrot.slane %v414, 5
      %v417 = vsel %vm297, %v412, %v416
      %v419 = vshrl.u32 %v256, 16
      %v421 = vrot.slane %v419, 4
      %v422 = vshll.u32 %v256, 16
      %v424 = vrot.slane %v422, 5
      %v425 = vor.u32 %v421, %v424
      %v426 = vrot.slane %v425, 4
      %v428 = vshll.u32 %v257, 16
      %v430 = vrot.slane %v428, 5
      %v431 = vsel %vm297, %v426, %v430
      %v432 = vshrl.u32 %v257, 16
      %v434 = vrot.slane %v432, 4
      %v435 = vor.u32 %v434, %v430
      %v436 = vrot.slane %v435, 4
      %v438 = vshll.u32 %v258, 16
      %v440 = vrot.slane %v438, 5
      %v441 = vsel %vm297, %v436, %v440
      %v443 = vshrl.u32 %v259, 16
      %v445 = vrot.slane %v443, 4
      %v446 = vshll.u32 %v259, 16
      %v448 = vrot.slane %v446, 5
      %v449 = vor.u32 %v445, %v448
      %v450 = vrot.slane %v449, 4
      %v452 = vshll.u32 %v260, 16
      %v454 = vrot.slane %v452, 5
      %v455 = vsel %vm297, %v450, %v454
      %v456 = vshrl.u32 %v260, 16
      %v458 = vrot.slane %v456, 4
      %v459 = vor.u32 %v458, %v454
      %v460 = vrot.slane %v459, 4
      %v462 = vshll.u32 %v261, 16
      %v464 = vrot.slane %v462, 5
      %v465 = vsel %vm297, %v460, %v464
      %v467 = vshrl.u32 %v262, 16
      %v469 = vrot.slane %v467, 4
      %v470 = vshll.u32 %v262, 16
      %v472 = vrot.slane %v470, 5
      %v473 = vor.u32 %v469, %v472
      %v474 = vrot.slane %v473, 4
      %v476 = vshll.u32 %v263, 16
      %v478 = vrot.slane %v476, 5
      %v479 = vsel %vm297, %v474, %v478
      %v480 = vshrl.u32 %v263, 16
      %v482 = vrot.slane %v480, 4
      %v483 = vor.u32 %v482, %v478
      %v484 = vrot.slane %v483, 4
      %v486 = vshll.u32 %v264, 16
      %v488 = vrot.slane %v486, 5
      %v489 = vsel %vm297, %v484, %v488
      %v491 = vshrl.u32 %v265, 16
      %v493 = vrot.slane %v491, 4
      %v494 = vshll.u32 %v265, 16
      %v496 = vrot.slane %v494, 5
      %v497 = vor.u32 %v493, %v496
      %v498 = vrot.slane %v497, 4
      %v500 = vshll.u32 %v266, 16
      %v502 = vrot.slane %v500, 5
      %v503 = vsel %vm297, %v498, %v502
      %v504 = vshrl.u32 %v266, 16
      %v506 = vrot.slane %v504, 4
      %v507 = vor.u32 %v506, %v502
      %v508 = vrot.slane %v507, 4
      %v510 = vshll.u32 %v267, 16
      %v512 = vrot.slane %v510, 5
      %v513 = vsel %vm297, %v508, %v512
      %v515 = vshrl.u32 %v268, 16
      %v517 = vrot.slane %v515, 4
      %v518 = vshll.u32 %v268, 16
      %v520 = vrot.slane %v518, 5
      %v521 = vor.u32 %v517, %v520
      %v522 = vrot.slane %v521, 4
      %v524 = vshll.u32 %v269, 16
      %v526 = vrot.slane %v524, 5
      %v527 = vsel %vm297, %v522, %v526
      %v528 = vshrl.u32 %v269, 16
      %v530 = vrot.slane %v528, 4
      %v531 = vor.u32 %v530, %v526
      %v532 = vrot.slane %v531, 4
      %v534 = vshll.u32 %v270, 16
      %v536 = vrot.slane %v534, 5
      %v537 = vsel %vm297, %v532, %v536
      %v539 = vshrl.u32 %v271, 16
      %v541 = vrot.slane %v539, 4
      %v542 = vshll.u32 %v271, 16
      %v544 = vrot.slane %v542, 5
      %v545 = vor.u32 %v541, %v544
      %v546 = vrot.slane %v545, 4
      %v548 = vshll.u32 %v272, 16
      %v550 = vrot.slane %v548, 5
      %v551 = vsel %vm297, %v546, %v550
      %v552 = vshrl.u32 %v272, 16
      %v554 = vrot.slane %v552, 4
      %v555 = vor.u32 %v554, %v550
      %v556 = vrot.slane %v555, 4
      %v558 = vshll.u32 %v273, 16
      %v560 = vrot.slane %v558, 5
      %v561 = vsel %vm297, %v556, %v560
      %v563 = vshrl.u32 %v274, 16
      %v565 = vrot.slane %v563, 4
      %v566 = vshll.u32 %v274, 16
      %v568 = vrot.slane %v566, 5
      %v569 = vor.u32 %v565, %v568
      %v570 = vrot.slane %v569, 4
      %v572 = vshll.u32 %v275, 16
      %v574 = vrot.slane %v572, 5
      %v575 = vsel %vm297, %v570, %v574
      %v576 = vshrl.u32 %v275, 16
      %v578 = vrot.slane %v576, 4
      %v579 = vor.u32 %v578, %v574
      %v580 = vrot.slane %v579, 4
      %v582 = vshll.u32 %v276, 16
      %v584 = vrot.slane %v582, 5
      %v585 = vsel %vm297, %v580, %v584
      %v587 = vshrl.u32 %v277, 16
      %v589 = vrot.slane %v587, 4
      %v590 = vshll.u32 %v277, 16
      %v592 = vrot.slane %v590, 5
      %v593 = vor.u32 %v589, %v592
      %v594 = vrot.slane %v593, 4
      %v596 = vshll.u32 %v278, 16
      %v598 = vrot.slane %v596, 5
      %v599 = vsel %vm297, %v594, %v598
      %v600 = vshrl.u32 %v278, 16
      %v602 = vrot.slane %v600, 4
      %v603 = vor.u32 %v602, %v598
      %v604 = vrot.slane %v603, 4
      %v606 = vshll.u32 %v279, 16
      %v608 = vrot.slane %v606, 5
      %v609 = vsel %vm297, %v604, %v608
      %v611 = vshrl.u32 %v280, 16
      %v613 = vrot.slane %v611, 4
      %v614 = vshll.u32 %v280, 16
      %v616 = vrot.slane %v614, 5
      %v617 = vor.u32 %v613, %v616
      %v618 = vrot.slane %v617, 4
      %v620 = vshll.u32 %v281, 16
      %v622 = vrot.slane %v620, 5
      %v623 = vsel %vm297, %v618, %v622
      %v624 = vshrl.u32 %v281, 16
      %v626 = vrot.slane %v624, 4
      %v627 = vor.u32 %v626, %v622
      %v628 = vrot.slane %v627, 4
      %v630 = vshll.u32 %v282, 16
      %v632 = vrot.slane %v630, 5
      %v633 = vsel %vm297, %v628, %v632
      %v635 = vshrl.u32 %v283, 16
      %v637 = vrot.slane %v635, 4
      %v638 = vshll.u32 %v283, 16
      %v640 = vrot.slane %v638, 5
      %v641 = vor.u32 %v637, %v640
      %v642 = vrot.slane %v641, 4
      %v644 = vshll.u32 %v284, 16
      %v646 = vrot.slane %v644, 5
      %v647 = vsel %vm297, %v642, %v646
      %v648 = vshrl.u32 %v284, 16
      %v650 = vrot.slane %v648, 4
      %v651 = vor.u32 %v650, %v646
      %v652 = vrot.slane %v651, 4
      %v654 = vshll.u32 %v285, 16
      %v656 = vrot.slane %v654, 5
      %v657 = vsel %vm297, %v652, %v656
      %v659 = vshrl.u32 %v286, 16
      %v661 = vrot.slane %v659, 4
      %v662 = vshll.u32 %v286, 16
      %v664 = vrot.slane %v662, 5
      %v665 = vor.u32 %v661, %v664
      %v666 = vrot.slane %v665, 4
      %v668 = vshll.u32 %v287, 16
      %v670 = vrot.slane %v668, 5
      %v671 = vsel %vm297, %v666, %v670
      %v672 = vshrl.u32 %v287, 16
      %v674 = vrot.slane %v672, 4
      %v675 = vor.u32 %v674, %v670
      %v676 = vrot.slane %v675, 4
      %v678 = vshll.u32 %v288, 16
      %v680 = vrot.slane %v678, 5
      %v681 = vsel %vm297, %v676, %v680
      %vm730 = vcmask 1042432
      %vm731 = vcmask 1046532
      %vm732 = vmor %vm730, %vm731
      %v733 = vrot.slane %v241, 5
      %v734 = vrot.slane %v733, 4
      %v735 = vrot.slane %v242, 5
      %v736 = vsel %vm732, %v734, %v735
      %v737 = vrot.slane %v735, 4
      %v738 = vrot.slane %v243, 5
      %v739 = vsel %vm732, %v737, %v738
      %v740 = vrot.slane %v244, 5
      %v741 = vrot.slane %v740, 4
      %v742 = vrot.slane %v245, 5
      %v743 = vsel %vm732, %v741, %v742
      %v744 = vrot.slane %v742, 4
      %v745 = vrot.slane %v246, 5
      %v746 = vsel %vm732, %v744, %v745
      %v747 = vrot.slane %v247, 5
      %v748 = vrot.slane %v747, 4
      %v749 = vrot.slane %v248, 5
      %v750 = vsel %vm732, %v748, %v749
      %v751 = vrot.slane %v749, 4
      %v752 = vrot.slane %v249, 5
      %v753 = vsel %vm732, %v751, %v752
      %v754 = vrot.slane %v250, 5
      %v755 = vrot.slane %v754, 4
      %v756 = vrot.slane %v251, 5
      %v757 = vsel %vm732, %v755, %v756
      %v758 = vrot.slane %v756, 4
      %v759 = vrot.slane %v252, 5
      %v760 = vsel %vm732, %v758, %v759
      %v761 = vrot.slane %v253, 5
      %v762 = vrot.slane %v761, 4
      %v763 = vrot.slane %v254, 5
      %v764 = vsel %vm732, %v762, %v763
      %v765 = vrot.slane %v763, 4
      %v766 = vrot.slane %v255, 5
      %v767 = vsel %vm732, %v765, %v766
      %v768 = vrot.slane %v256, 5
      %v769 = vrot.slane %v768, 4
      %v770 = vrot.slane %v257, 5
      %v771 = vsel %vm732, %v769, %v770
      %v772 = vrot.slane %v770, 4
      %v773 = vrot.slane %v258, 5
      %v774 = vsel %vm732, %v772, %v773
      %v775 = vrot.slane %v259, 5
      %v776 = vrot.slane %v775, 4
      %v777 = vrot.slane %v260, 5
      %v778 = vsel %vm732, %v776, %v777
      %v779 = vrot.slane %v777, 4
      %v780 = vrot.slane %v261, 5
      %v781 = vsel %vm732, %v779, %v780
      %v782 = vrot.slane %v262, 5
      %v783 = vrot.slane %v782, 4
      %v784 = vrot.slane %v263, 5
      %v785 = vsel %vm732, %v783, %v784
      %v786 = vrot.slane %v784, 4
      %v787 = vrot.slane %v264, 5
      %v788 = vsel %vm732, %v786, %v787
      %v789 = vrot.slane %v265, 5
      %v790 = vrot.slane %v789, 4
      %v791 = vrot.slane %v266, 5
      %v792 = vsel %vm732, %v790, %v791
      %v793 = vrot.slane %v791, 4
      %v794 = vrot.slane %v267, 5
      %v795 = vsel %vm732, %v793, %v794
      %v796 = vrot.slane %v268, 5
      %v797 = vrot.slane %v796, 4
      %v798 = vrot.slane %v269, 5
      %v799 = vsel %vm732, %v797, %v798
      %v800 = vrot.slane %v798, 4
      %v801 = vrot.slane %v270, 5
      %v802 = vsel %vm732, %v800, %v801
      %v803 = vrot.slane %v271, 5
      %v804 = vrot.slane %v803, 4
      %v805 = vrot.slane %v272, 5
      %v806 = vsel %vm732, %v804, %v805
      %v807 = vrot.slane %v805, 4
      %v808 = vrot.slane %v273, 5
      %v809 = vsel %vm732, %v807, %v808
      %v810 = vrot.slane %v274, 5
      %v811 = vrot.slane %v810, 4
      %v812 = vrot.slane %v275, 5
      %v813 = vsel %vm732, %v811, %v812
      %v814 = vrot.slane %v812, 4
      %v815 = vrot.slane %v276, 5
      %v816 = vsel %vm732, %v814, %v815
      %v817 = vrot.slane %v277, 5
      %v818 = vrot.slane %v817, 4
      %v819 = vrot.slane %v278, 5
      %v820 = vsel %vm732, %v818, %v819
      %v821 = vrot.slane %v819, 4
      %v822 = vrot.slane %v279, 5
      %v823 = vsel %vm732, %v821, %v822
      %v824 = vrot.slane %v280, 5
      %v825 = vrot.slane %v824, 4
      %v826 = vrot.slane %v281, 5
      %v827 = vsel %vm732, %v825, %v826
      %v828 = vrot.slane %v826, 4
      %v829 = vrot.slane %v282, 5
      %v830 = vsel %vm732, %v828, %v829
      %v831 = vrot.slane %v283, 5
      %v832 = vrot.slane %v831, 4
      %v833 = vrot.slane %v284, 5
      %v834 = vsel %vm732, %v832, %v833
      %v835 = vrot.slane %v833, 4
      %v836 = vrot.slane %v285, 5
      %v837 = vsel %vm732, %v835, %v836
      %v838 = vrot.slane %v286, 5
      %v839 = vrot.slane %v838, 4
      %v840 = vrot.slane %v287, 5
      %v841 = vsel %vm732, %v839, %v840
      %v842 = vrot.slane %v840, 4
      %v843 = vrot.slane %v288, 5
      %v844 = vsel %vm732, %v842, %v843
      %v846 = vshrl.u32 %v289, 16
      %v848 = vrot.slane %v846, 4
      %v849 = vshll.u32 %v289, 16
      %v851 = vrot.slane %v849, 5
      %v852 = vor.u32 %v848, %v851
      %v853 = vrot.slane %v852, 4
      %v855 = vshll.u32 %v290, 16
      %v857 = vrot.slane %v855, 5
      %v858 = vsel %vm297, %v853, %v857
      %v859 = vshrl.u32 %v290, 16
      %v861 = vrot.slane %v859, 4
      %v862 = vor.u32 %v861, %v857
      %v863 = vrot.slane %v862, 4
      %v865 = vshll.u32 %v291, 16
      %v867 = vrot.slane %v865, 5
      %v868 = vsel %vm297, %v863, %v867
      %v872 = vrot.slane %v289, 5
      %v873 = vrot.slane %v872, 4
      %v874 = vrot.slane %v290, 5
      %v875 = vsel %vm732, %v873, %v874
      %v876 = vrot.slane %v874, 4
      %v877 = vrot.slane %v291, 5
      %v878 = vsel %vm732, %v876, %v877
      %v880 = vshrl.u32 %v292, 16
      %v882 = vrot.slane %v880, 4
      %v883 = vshll.u32 %v292, 16
      %v885 = vrot.slane %v883, 5
      %v886 = vor.u32 %v882, %v885
      %v887 = vrot.slane %v886, 4
      %v889 = vshll.u32 %v293, 16
      %v891 = vrot.slane %v889, 5
      %v892 = vsel %vm297, %v887, %v891
      %v893 = vshrl.u32 %v293, 16
      %v895 = vrot.slane %v893, 4
      %v896 = vor.u32 %v895, %v891
      %v897 = vrot.slane %v896, 4
      %v899 = vshll.u32 %v294, 16
      %v901 = vrot.slane %v899, 5
      %v902 = vsel %vm297, %v897, %v901
      %v906 = vrot.slane %v292, 5
      %v907 = vrot.slane %v906, 4
      %v908 = vrot.slane %v293, 5
      %v909 = vsel %vm732, %v907, %v908
      %v910 = vrot.slane %v908, 4
      %v911 = vrot.slane %v294, 5
      %v912 = vsel %vm732, %v910, %v911
      %v913 = vunpack.c.l.b16 %v241
      %v914 = vunpack.c.l.b16 %v242
      %v915 = vunpack.c.l.b16 %v244
      %v916 = vunpack.c.l.b16 %v245
      %v917 = vunpack.c.l.b16 %v247
      %v918 = vunpack.c.l.b16 %v248
      %v919 = vunpack.c.l.b16 %v250
      %v920 = vunpack.c.l.b16 %v251
      %v921 = vunpack.c.l.b16 %v253
      %v922 = vunpack.c.l.b16 %v254
      %v923 = vunpack.c.l.b16 %v256
      %v924 = vunpack.c.l.b16 %v257
      %v925 = vunpack.c.l.b16 %v259
      %v926 = vunpack.c.l.b16 %v260
      %v927 = vunpack.c.l.b16 %v262
      %v928 = vunpack.c.l.b16 %v263
      %v929 = vunpack.c.l.b16 %v265
      %v930 = vunpack.c.l.b16 %v266
      %v931 = vunpack.c.l.b16 %v268
      %v932 = vunpack.c.l.b16 %v269
      %v933 = vunpack.c.l.b16 %v271
      %v934 = vunpack.c.l.b16 %v272
      %v935 = vunpack.c.l.b16 %v274
      %v936 = vunpack.c.l.b16 %v275
      %v937 = vunpack.c.l.b16 %v277
      %v938 = vunpack.c.l.b16 %v278
      %v939 = vunpack.c.l.b16 %v280
      %v940 = vunpack.c.l.b16 %v281
      %v941 = vunpack.c.l.b16 %v283
      %v942 = vunpack.c.l.b16 %v284
      %v943 = vunpack.c.l.b16 %v286
      %v944 = vunpack.c.l.b16 %v287
      %v945 = vpack.c.b16 %v914, %v913
      %v946 = vpack.c.b16 %v916, %v915
      %v947 = vpack.c.b16 %v918, %v917
      %v948 = vpack.c.b16 %v920, %v919
      %v949 = vpack.c.b16 %v922, %v921
      %v950 = vpack.c.b16 %v924, %v923
      %v951 = vpack.c.b16 %v926, %v925
      %v952 = vpack.c.b16 %v928, %v927
      %v953 = vpack.c.b16 %v930, %v929
      %v954 = vpack.c.b16 %v932, %v931
      %v955 = vpack.c.b16 %v934, %v933
      %v956 = vpack.c.b16 %v936, %v935
      %v957 = vpack.c.b16 %v938, %v937
      %v958 = vpack.c.b16 %v940, %v939
      %v959 = vpack.c.b16 %v942, %v941
      %v960 = vpack.c.b16 %v944, %v943
      %v961 = vunpack.c.l.b16 %v311
      %v962 = vunpack.c.l.b16 %v321
      %v963 = vunpack.c.l.b16 %v335
      %v964 = vunpack.c.l.b16 %v345
      %v965 = vunpack.c.l.b16 %v359
      %v966 = vunpack.c.l.b16 %v369
      %v967 = vunpack.c.l.b16 %v383
      %v968 = vunpack.c.l.b16 %v393
      %v969 = vunpack.c.l.b16 %v407
      %v970 = vunpack.c.l.b16 %v417
      %v971 = vunpack.c.l.b16 %v431
      %v972 = vunpack.c.l.b16 %v441
      %v973 = vunpack.c.l.b16 %v455
      %v974 = vunpack.c.l.b16 %v465
      %v975 = vunpack.c.l.b16 %v479
      %v976 = vunpack.c.l.b16 %v489
      %v977 = vunpack.c.l.b16 %v503
      %v978 = vunpack.c.l.b16 %v513
      %v979 = vunpack.c.l.b16 %v527
      %v980 = vunpack.c.l.b16 %v537
      %v981 = vunpack.c.l.b16 %v551
      %v982 = vunpack.c.l.b16 %v561
      %v983 = vunpack.c.l.b16 %v575
      %v984 = vunpack.c.l.b16 %v585
      %v985 = vunpack.c.l.b16 %v599
      %v986 = vunpack.c.l.b16 %v609
      %v987 = vunpack.c.l.b16 %v623
      %v988 = vunpack.c.l.b16 %v633
      %v989 = vunpack.c.l.b16 %v647
      %v990 = vunpack.c.l.b16 %v657
      %v991 = vunpack.c.l.b16 %v671
      %v992 = vunpack.c.l.b16 %v681
      %v993 = vpack.c.b16 %v962, %v961
      %v994 = vpack.c.b16 %v964, %v963
      %v995 = vpack.c.b16 %v966, %v965
      %v996 = vpack.c.b16 %v968, %v967
      %v997 = vpack.c.b16 %v970, %v969
      %v998 = vpack.c.b16 %v972, %v971
      %v999 = vpack.c.b16 %v974, %v973
      %v1000 = vpack.c.b16 %v976, %v975
      %v1001 = vpack.c.b16 %v978, %v977
      %v1002 = vpack.c.b16 %v980, %v979
      %v1003 = vpack.c.b16 %v982, %v981
      %v1004 = vpack.c.b16 %v984, %v983
      %v1005 = vpack.c.b16 %v986, %v985
      %v1006 = vpack.c.b16 %v988, %v987
      %v1007 = vpack.c.b16 %v990, %v989
      %v1008 = vpack.c.b16 %v992, %v991
      %1009 = vrot.lane.b32.xlu0 %v993, 4
      %v1010 = vpop.permute.xlu0 %1009
      %1011 = vrot.lane.b32.xlu0 %v994, 4
      %v1012 = vpop.permute.xlu0 %1011
      %1013 = vrot.lane.b32.xlu0 %v995, 4
      %v1014 = vpop.permute.xlu0 %1013
      %1015 = vrot.lane.b32.xlu0 %v996, 4
      %v1016 = vpop.permute.xlu0 %1015
      %1017 = vrot.lane.b32.xlu0 %v997, 4
      %v1018 = vpop.permute.xlu0 %1017
      %1019 = vrot.lane.b32.xlu0 %v998, 4
      %v1020 = vpop.permute.xlu0 %1019
      %1021 = vrot.lane.b32.xlu0 %v999, 4
      %v1022 = vpop.permute.xlu0 %1021
      %1023 = vrot.lane.b32.xlu0 %v1000, 4
      %v1024 = vpop.permute.xlu0 %1023
      %1025 = vrot.lane.b32.xlu0 %v1001, 4
      %v1026 = vpop.permute.xlu0 %1025
      %1027 = vrot.lane.b32.xlu0 %v1002, 4
      %v1028 = vpop.permute.xlu0 %1027
      %1029 = vrot.lane.b32.xlu0 %v1003, 4
      %v1030 = vpop.permute.xlu0 %1029
      %1031 = vrot.lane.b32.xlu0 %v1004, 4
      %v1032 = vpop.permute.xlu0 %1031
      %1033 = vrot.lane.b32.xlu0 %v1005, 4
      %v1034 = vpop.permute.xlu0 %1033
      %1035 = vrot.lane.b32.xlu0 %v1006, 4
      %v1036 = vpop.permute.xlu0 %1035
      %1037 = vrot.lane.b32.xlu0 %v1007, 4
      %v1038 = vpop.permute.xlu0 %1037
      %1039 = vrot.lane.b32.xlu0 %v1008, 4
      %v1040 = vpop.permute.xlu0 %1039
      %v1041 = vunpack.c.l.b16 %v736
      %v1042 = vunpack.c.l.b16 %v739
      %v1043 = vunpack.c.l.b16 %v743
      %v1044 = vunpack.c.l.b16 %v746
      %v1045 = vunpack.c.l.b16 %v750
      %v1046 = vunpack.c.l.b16 %v753
      %v1047 = vunpack.c.l.b16 %v757
      %v1048 = vunpack.c.l.b16 %v760
      %v1049 = vunpack.c.l.b16 %v764
      %v1050 = vunpack.c.l.b16 %v767
      %v1051 = vunpack.c.l.b16 %v771
      %v1052 = vunpack.c.l.b16 %v774
      %v1053 = vunpack.c.l.b16 %v778
      %v1054 = vunpack.c.l.b16 %v781
      %v1055 = vunpack.c.l.b16 %v785
      %v1056 = vunpack.c.l.b16 %v788
      %v1057 = vunpack.c.l.b16 %v792
      %v1058 = vunpack.c.l.b16 %v795
      %v1059 = vunpack.c.l.b16 %v799
      %v1060 = vunpack.c.l.b16 %v802
      %v1061 = vunpack.c.l.b16 %v806
      %v1062 = vunpack.c.l.b16 %v809
      %v1063 = vunpack.c.l.b16 %v813
      %v1064 = vunpack.c.l.b16 %v816
      %v1065 = vunpack.c.l.b16 %v820
      %v1066 = vunpack.c.l.b16 %v823
      %v1067 = vunpack.c.l.b16 %v827
      %v1068 = vunpack.c.l.b16 %v830
      %v1069 = vunpack.c.l.b16 %v834
      %v1070 = vunpack.c.l.b16 %v837
      %v1071 = vunpack.c.l.b16 %v841
      %v1072 = vunpack.c.l.b16 %v844
      %v1073 = vpack.c.b16 %v1042, %v1041
      %v1074 = vpack.c.b16 %v1044, %v1043
      %v1075 = vpack.c.b16 %v1046, %v1045
      %v1076 = vpack.c.b16 %v1048, %v1047
      %v1077 = vpack.c.b16 %v1050, %v1049
      %v1078 = vpack.c.b16 %v1052, %v1051
      %v1079 = vpack.c.b16 %v1054, %v1053
      %v1080 = vpack.c.b16 %v1056, %v1055
      %v1081 = vpack.c.b16 %v1058, %v1057
      %v1082 = vpack.c.b16 %v1060, %v1059
      %v1083 = vpack.c.b16 %v1062, %v1061
      %v1084 = vpack.c.b16 %v1064, %v1063
      %v1085 = vpack.c.b16 %v1066, %v1065
      %v1086 = vpack.c.b16 %v1068, %v1067
      %v1087 = vpack.c.b16 %v1070, %v1069
      %v1088 = vpack.c.b16 %v1072, %v1071
      %1089 = vrot.lane.b32.xlu0 %v1073, 8
      %v1090 = vpop.permute.xlu0 %1089
      %1091 = vrot.lane.b32.xlu0 %v1074, 8
      %v1092 = vpop.permute.xlu0 %1091
      %1093 = vrot.lane.b32.xlu0 %v1075, 8
      %v1094 = vpop.permute.xlu0 %1093
      %1095 = vrot.lane.b32.xlu0 %v1076, 8
      %v1096 = vpop.permute.xlu0 %1095
      %1097 = vrot.lane.b32.xlu0 %v1077, 8
      %v1098 = vpop.permute.xlu0 %1097
      %1099 = vrot.lane.b32.xlu0 %v1078, 8
      %v1100 = vpop.permute.xlu0 %1099
      %1101 = vrot.lane.b32.xlu0 %v1079, 8
      %v1102 = vpop.permute.xlu0 %1101
      %1103 = vrot.lane.b32.xlu0 %v1080, 8
      %v1104 = vpop.permute.xlu0 %1103
      %1105 = vrot.lane.b32.xlu0 %v1081, 8
      %v1106 = vpop.permute.xlu0 %1105
      %1107 = vrot.lane.b32.xlu0 %v1082, 8
      %v1108 = vpop.permute.xlu0 %1107
      %1109 = vrot.lane.b32.xlu0 %v1083, 8
      %v1110 = vpop.permute.xlu0 %1109
      %1111 = vrot.lane.b32.xlu0 %v1084, 8
      %v1112 = vpop.permute.xlu0 %1111
      %1113 = vrot.lane.b32.xlu0 %v1085, 8
      %v1114 = vpop.permute.xlu0 %1113
      %1115 = vrot.lane.b32.xlu0 %v1086, 8
      %v1116 = vpop.permute.xlu0 %1115
      %1117 = vrot.lane.b32.xlu0 %v1087, 8
      %v1118 = vpop.permute.xlu0 %1117
      %1119 = vrot.lane.b32.xlu0 %v1088, 8
      %v1120 = vpop.permute.xlu0 %1119
      %v1121 = vunpack.c.l.b16 %v289
      %v1122 = vunpack.c.l.b16 %v290
      %v1123 = vpack.c.b16 %v1122, %v1121
      %1124 = vrot.lane.b32.xlu0 %v946, 12
      %v1125 = vpop.permute.xlu0 %1124
      %1126 = vrot.lane.b32.xlu0 %v947, 12
      %v1127 = vpop.permute.xlu0 %1126
      %1128 = vrot.lane.b32.xlu0 %v948, 12
      %v1129 = vpop.permute.xlu0 %1128
      %1130 = vrot.lane.b32.xlu0 %v949, 12
      %v1131 = vpop.permute.xlu0 %1130
      %1132 = vrot.lane.b32.xlu0 %v950, 12
      %v1133 = vpop.permute.xlu0 %1132
      %1134 = vrot.lane.b32.xlu0 %v951, 12
      %v1135 = vpop.permute.xlu0 %1134
      %1136 = vrot.lane.b32.xlu0 %v952, 12
      %v1137 = vpop.permute.xlu0 %1136
      %1138 = vrot.lane.b32.xlu0 %v953, 12
      %v1139 = vpop.permute.xlu0 %1138
      %1140 = vrot.lane.b32.xlu0 %v954, 12
      %v1141 = vpop.permute.xlu0 %1140
      %1142 = vrot.lane.b32.xlu0 %v955, 12
      %v1143 = vpop.permute.xlu0 %1142
      %1144 = vrot.lane.b32.xlu0 %v956, 12
      %v1145 = vpop.permute.xlu0 %1144
      %1146 = vrot.lane.b32.xlu0 %v957, 12
      %v1147 = vpop.permute.xlu0 %1146
      %1148 = vrot.lane.b32.xlu0 %v958, 12
      %v1149 = vpop.permute.xlu0 %1148
      %1150 = vrot.lane.b32.xlu0 %v959, 12
      %v1151 = vpop.permute.xlu0 %1150
      %1152 = vrot.lane.b32.xlu0 %v960, 12
      %v1153 = vpop.permute.xlu0 %1152
      %1154 = vrot.lane.b32.xlu0 %v1123, 12
      %v1155 = vpop.permute.xlu0 %1154
      %v1156 = vunpack.c.l.b16 %v858
      %v1157 = vunpack.c.l.b16 %v868
      %v1158 = vpack.c.b16 %v1157, %v1156
      %1159 = vrot.lane.b32.xlu0 %v994, 16
      %v1160 = vpop.permute.xlu0 %1159
      %1161 = vrot.lane.b32.xlu0 %v995, 16
      %v1162 = vpop.permute.xlu0 %1161
      %1163 = vrot.lane.b32.xlu0 %v996, 16
      %v1164 = vpop.permute.xlu0 %1163
      %1165 = vrot.lane.b32.xlu0 %v997, 16
      %v1166 = vpop.permute.xlu0 %1165
      %1167 = vrot.lane.b32.xlu0 %v998, 16
      %v1168 = vpop.permute.xlu0 %1167
      %1169 = vrot.lane.b32.xlu0 %v999, 16
      %v1170 = vpop.permute.xlu0 %1169
      %1171 = vrot.lane.b32.xlu0 %v1000, 16
      %v1172 = vpop.permute.xlu0 %1171
      %1173 = vrot.lane.b32.xlu0 %v1001, 16
      %v1174 = vpop.permute.xlu0 %1173
      %1175 = vrot.lane.b32.xlu0 %v1002, 16
      %v1176 = vpop.permute.xlu0 %1175
      %1177 = vrot.lane.b32.xlu0 %v1003, 16
      %v1178 = vpop.permute.xlu0 %1177
      %1179 = vrot.lane.b32.xlu0 %v1004, 16
      %v1180 = vpop.permute.xlu0 %1179
      %1181 = vrot.lane.b32.xlu0 %v1005, 16
      %v1182 = vpop.permute.xlu0 %1181
      %1183 = vrot.lane.b32.xlu0 %v1006, 16
      %v1184 = vpop.permute.xlu0 %1183
      %1185 = vrot.lane.b32.xlu0 %v1007, 16
      %v1186 = vpop.permute.xlu0 %1185
      %1187 = vrot.lane.b32.xlu0 %v1008, 16
      %v1188 = vpop.permute.xlu0 %1187
      %1189 = vrot.lane.b32.xlu0 %v1158, 16
      %v1190 = vpop.permute.xlu0 %1189
      %v1191 = vunpack.c.l.b16 %v875
      %v1192 = vunpack.c.l.b16 %v878
      %v1193 = vpack.c.b16 %v1192, %v1191
      %1194 = vrot.lane.b32.xlu0 %v1074, 20
      %v1195 = vpop.permute.xlu0 %1194
      %1196 = vrot.lane.b32.xlu0 %v1075, 20
      %v1197 = vpop.permute.xlu0 %1196
      %1198 = vrot.lane.b32.xlu0 %v1076, 20
      %v1199 = vpop.permute.xlu0 %1198
      %1200 = vrot.lane.b32.xlu0 %v1077, 20
      %v1201 = vpop.permute.xlu0 %1200
      %1202 = vrot.lane.b32.xlu0 %v1078, 20
      %v1203 = vpop.permute.xlu0 %1202
      %1204 = vrot.lane.b32.xlu0 %v1079, 20
      %v1205 = vpop.permute.xlu0 %1204
      %1206 = vrot.lane.b32.xlu0 %v1080, 20
      %v1207 = vpop.permute.xlu0 %1206
      %1208 = vrot.lane.b32.xlu0 %v1081, 20
      %v1209 = vpop.permute.xlu0 %1208
      %1210 = vrot.lane.b32.xlu0 %v1082, 20
      %v1211 = vpop.permute.xlu0 %1210
      %1212 = vrot.lane.b32.xlu0 %v1083, 20
      %v1213 = vpop.permute.xlu0 %1212
      %1214 = vrot.lane.b32.xlu0 %v1084, 20
      %v1215 = vpop.permute.xlu0 %1214
      %1216 = vrot.lane.b32.xlu0 %v1085, 20
      %v1217 = vpop.permute.xlu0 %1216
      %1218 = vrot.lane.b32.xlu0 %v1086, 20
      %v1219 = vpop.permute.xlu0 %1218
      %1220 = vrot.lane.b32.xlu0 %v1087, 20
      %v1221 = vpop.permute.xlu0 %1220
      %1222 = vrot.lane.b32.xlu0 %v1088, 20
      %v1223 = vpop.permute.xlu0 %1222
      %1224 = vrot.lane.b32.xlu0 %v1193, 20
      %v1225 = vpop.permute.xlu0 %1224
      %v1226 = vunpack.c.l.b16 %v292
      %v1227 = vunpack.c.l.b16 %v293
      %v1228 = vpack.c.b16 %v1227, %v1226
      %1229 = vrot.lane.b32.xlu0 %v947, 24
      %v1230 = vpop.permute.xlu0 %1229
      %1231 = vrot.lane.b32.xlu0 %v948, 24
      %v1232 = vpop.permute.xlu0 %1231
      %1233 = vrot.lane.b32.xlu0 %v949, 24
      %v1234 = vpop.permute.xlu0 %1233
      %1235 = vrot.lane.b32.xlu0 %v950, 24
      %v1236 = vpop.permute.xlu0 %1235
      %1237 = vrot.lane.b32.xlu0 %v951, 24
      %v1238 = vpop.permute.xlu0 %1237
      %1239 = vrot.lane.b32.xlu0 %v952, 24
      %v1240 = vpop.permute.xlu0 %1239
      %1241 = vrot.lane.b32.xlu0 %v953, 24
      %v1242 = vpop.permute.xlu0 %1241
      %1243 = vrot.lane.b32.xlu0 %v954, 24
      %v1244 = vpop.permute.xlu0 %1243
      %1245 = vrot.lane.b32.xlu0 %v955, 24
      %v1246 = vpop.permute.xlu0 %1245
      %1247 = vrot.lane.b32.xlu0 %v956, 24
      %v1248 = vpop.permute.xlu0 %1247
      %1249 = vrot.lane.b32.xlu0 %v957, 24
      %v1250 = vpop.permute.xlu0 %1249
      %1251 = vrot.lane.b32.xlu0 %v958, 24
      %v1252 = vpop.permute.xlu0 %1251
      %1253 = vrot.lane.b32.xlu0 %v959, 24
      %v1254 = vpop.permute.xlu0 %1253
      %1255 = vrot.lane.b32.xlu0 %v960, 24
      %v1256 = vpop.permute.xlu0 %1255
      %1257 = vrot.lane.b32.xlu0 %v1123, 24
      %v1258 = vpop.permute.xlu0 %1257
      %1259 = vrot.lane.b32.xlu0 %v1228, 24
      %v1260 = vpop.permute.xlu0 %1259
      %v1261 = vunpack.c.l.b16 %v892
      %v1262 = vunpack.c.l.b16 %v902
      %v1263 = vpack.c.b16 %v1262, %v1261
      %1264 = vrot.lane.b32.xlu0 %v995, 28
      %v1265 = vpop.permute.xlu0 %1264
      %1266 = vrot.lane.b32.xlu0 %v996, 28
      %v1267 = vpop.permute.xlu0 %1266
      %1268 = vrot.lane.b32.xlu0 %v997, 28
      %v1269 = vpop.permute.xlu0 %1268
      %1270 = vrot.lane.b32.xlu0 %v998, 28
      %v1271 = vpop.permute.xlu0 %1270
      %1272 = vrot.lane.b32.xlu0 %v999, 28
      %v1273 = vpop.permute.xlu0 %1272
      %1274 = vrot.lane.b32.xlu0 %v1000, 28
      %v1275 = vpop.permute.xlu0 %1274
      %1276 = vrot.lane.b32.xlu0 %v1001, 28
      %v1277 = vpop.permute.xlu0 %1276
      %1278 = vrot.lane.b32.xlu0 %v1002, 28
      %v1279 = vpop.permute.xlu0 %1278
      %1280 = vrot.lane.b32.xlu0 %v1003, 28
      %v1281 = vpop.permute.xlu0 %1280
      %1282 = vrot.lane.b32.xlu0 %v1004, 28
      %v1283 = vpop.permute.xlu0 %1282
      %1284 = vrot.lane.b32.xlu0 %v1005, 28
      %v1285 = vpop.permute.xlu0 %1284
      %1286 = vrot.lane.b32.xlu0 %v1006, 28
      %v1287 = vpop.permute.xlu0 %1286
      %1288 = vrot.lane.b32.xlu0 %v1007, 28
      %v1289 = vpop.permute.xlu0 %1288
      %1290 = vrot.lane.b32.xlu0 %v1008, 28
      %v1291 = vpop.permute.xlu0 %1290
      %1292 = vrot.lane.b32.xlu0 %v1158, 28
      %v1293 = vpop.permute.xlu0 %1292
      %1294 = vrot.lane.b32.xlu0 %v1263, 28
      %v1295 = vpop.permute.xlu0 %1294
      %v1296 = vunpack.c.l.b16 %v909
      %v1297 = vunpack.c.l.b16 %v912
      %v1298 = vpack.c.b16 %v1297, %v1296
      %1299 = vrot.lane.b32.xlu0 %v1075, 32
      %v1300 = vpop.permute.xlu0 %1299
      %1301 = vrot.lane.b32.xlu0 %v1076, 32
      %v1302 = vpop.permute.xlu0 %1301
      %1303 = vrot.lane.b32.xlu0 %v1077, 32
      %v1304 = vpop.permute.xlu0 %1303
      %1305 = vrot.lane.b32.xlu0 %v1078, 32
      %v1306 = vpop.permute.xlu0 %1305
      %1307 = vrot.lane.b32.xlu0 %v1079, 32
      %v1308 = vpop.permute.xlu0 %1307
      %1309 = vrot.lane.b32.xlu0 %v1080, 32
      %v1310 = vpop.permute.xlu0 %1309
      %1311 = vrot.lane.b32.xlu0 %v1081, 32
      %v1312 = vpop.permute.xlu0 %1311
      %1313 = vrot.lane.b32.xlu0 %v1082, 32
      %v1314 = vpop.permute.xlu0 %1313
      %1315 = vrot.lane.b32.xlu0 %v1083, 32
      %v1316 = vpop.permute.xlu0 %1315
      %1317 = vrot.lane.b32.xlu0 %v1084, 32
      %v1318 = vpop.permute.xlu0 %1317
      %1319 = vrot.lane.b32.xlu0 %v1085, 32
      %v1320 = vpop.permute.xlu0 %1319
      %1321 = vrot.lane.b32.xlu0 %v1086, 32
      %v1322 = vpop.permute.xlu0 %1321
      %1323 = vrot.lane.b32.xlu0 %v1087, 32
      %v1324 = vpop.permute.xlu0 %1323
      %1325 = vrot.lane.b32.xlu0 %v1088, 32
      %v1326 = vpop.permute.xlu0 %1325
      %1327 = vrot.lane.b32.xlu0 %v1193, 32
      %v1328 = vpop.permute.xlu0 %1327
      %1329 = vrot.lane.b32.xlu0 %v1298, 32
      %v1330 = vpop.permute.xlu0 %1329
      %vm1331 = vcmask 31744
      %v1334 = vsel %vm1331, %v945, %v1010
      %v1337 = vsel %vm1331, %v946, %v1012
      %v1340 = vsel %vm1331, %v947, %v1014
      %v1343 = vsel %vm1331, %v948, %v1016
      %v1346 = vsel %vm1331, %v949, %v1018
      %v1349 = vsel %vm1331, %v950, %v1020
      %v1352 = vsel %vm1331, %v951, %v1022
      %v1355 = vsel %vm1331, %v952, %v1024
      %v1358 = vsel %vm1331, %v953, %v1026
      %v1361 = vsel %vm1331, %v954, %v1028
      %v1364 = vsel %vm1331, %v955, %v1030
      %v1367 = vsel %vm1331, %v956, %v1032
      %v1370 = vsel %vm1331, %v957, %v1034
      %v1373 = vsel %vm1331, %v958, %v1036
      %v1376 = vsel %vm1331, %v959, %v1038
      %v1379 = vsel %vm1331, %v960, %v1040
      %vm1380 = vcmask 64512
      %v1382 = vsel %vm1380, %v1334, %v1090
      %v1384 = vsel %vm1380, %v1337, %v1092
      %v1386 = vsel %vm1380, %v1340, %v1094
      %v1388 = vsel %vm1380, %v1343, %v1096
      %v1390 = vsel %vm1380, %v1346, %v1098
      %v1392 = vsel %vm1380, %v1349, %v1100
      %v1394 = vsel %vm1380, %v1352, %v1102
      %v1396 = vsel %vm1380, %v1355, %v1104
      %v1398 = vsel %vm1380, %v1358, %v1106
      %v1400 = vsel %vm1380, %v1361, %v1108
      %v1402 = vsel %vm1380, %v1364, %v1110
      %v1404 = vsel %vm1380, %v1367, %v1112
      %v1406 = vsel %vm1380, %v1370, %v1114
      %v1408 = vsel %vm1380, %v1373, %v1116
      %v1410 = vsel %vm1380, %v1376, %v1118
      %v1412 = vsel %vm1380, %v1379, %v1120
      %vm1413 = vcmask 97280
      %v1415 = vsel %vm1413, %v1382, %v1125
      %v1417 = vsel %vm1413, %v1384, %v1127
      %v1419 = vsel %vm1413, %v1386, %v1129
      %v1421 = vsel %vm1413, %v1388, %v1131
      %v1423 = vsel %vm1413, %v1390, %v1133
      %v1425 = vsel %vm1413, %v1392, %v1135
      %v1427 = vsel %vm1413, %v1394, %v1137
      %v1429 = vsel %vm1413, %v1396, %v1139
      %v1431 = vsel %vm1413, %v1398, %v1141
      %v1433 = vsel %vm1413, %v1400, %v1143
      %v1435 = vsel %vm1413, %v1402, %v1145
      %v1437 = vsel %vm1413, %v1404, %v1147
      %v1439 = vsel %vm1413, %v1406, %v1149
      %v1441 = vsel %vm1413, %v1408, %v1151
      %v1443 = vsel %vm1413, %v1410, %v1153
      %v1445 = vsel %vm1413, %v1412, %v1155
      %vm1446 = vcmask 130048
      %v1448 = vsel %vm1446, %v1415, %v1160
      %v1450 = vsel %vm1446, %v1417, %v1162
      %v1452 = vsel %vm1446, %v1419, %v1164
      %v1454 = vsel %vm1446, %v1421, %v1166
      %v1456 = vsel %vm1446, %v1423, %v1168
      %v1458 = vsel %vm1446, %v1425, %v1170
      %v1460 = vsel %vm1446, %v1427, %v1172
      %v1462 = vsel %vm1446, %v1429, %v1174
      %v1464 = vsel %vm1446, %v1431, %v1176
      %v1466 = vsel %vm1446, %v1433, %v1178
      %v1468 = vsel %vm1446, %v1435, %v1180
      %v1470 = vsel %vm1446, %v1437, %v1182
      %v1472 = vsel %vm1446, %v1439, %v1184
      %v1474 = vsel %vm1446, %v1441, %v1186
      %v1476 = vsel %vm1446, %v1443, %v1188
      %v1478 = vsel %vm1446, %v1445, %v1190
      %vm1479 = vcmask 162816
      %v1481 = vsel %vm1479, %v1448, %v1195
      %v1483 = vsel %vm1479, %v1450, %v1197
      %v1485 = vsel %vm1479, %v1452, %v1199
      %v1487 = vsel %vm1479, %v1454, %v1201
      %v1489 = vsel %vm1479, %v1456, %v1203
      %v1491 = vsel %vm1479, %v1458, %v1205
      %v1493 = vsel %vm1479, %v1460, %v1207
      %v1495 = vsel %vm1479, %v1462, %v1209
      %v1497 = vsel %vm1479, %v1464, %v1211
      %v1499 = vsel %vm1479, %v1466, %v1213
      %v1501 = vsel %vm1479, %v1468, %v1215
      %v1503 = vsel %vm1479, %v1470, %v1217
      %v1505 = vsel %vm1479, %v1472, %v1219
      %v1507 = vsel %vm1479, %v1474, %v1221
      %v1509 = vsel %vm1479, %v1476, %v1223
      %v1511 = vsel %vm1479, %v1478, %v1225
      %vm1512 = vcmask 195584
      %v1514 = vsel %vm1512, %v1481, %v1230
      %v1516 = vsel %vm1512, %v1483, %v1232
      %v1518 = vsel %vm1512, %v1485, %v1234
      %v1520 = vsel %vm1512, %v1487, %v1236
      %v1522 = vsel %vm1512, %v1489, %v1238
      %v1524 = vsel %vm1512, %v1491, %v1240
      %v1526 = vsel %vm1512, %v1493, %v1242
      %v1528 = vsel %vm1512, %v1495, %v1244
      %v1530 = vsel %vm1512, %v1497, %v1246
      %v1532 = vsel %vm1512, %v1499, %v1248
      %v1534 = vsel %vm1512, %v1501, %v1250
      %v1536 = vsel %vm1512, %v1503, %v1252
      %v1538 = vsel %vm1512, %v1505, %v1254
      %v1540 = vsel %vm1512, %v1507, %v1256
      %v1542 = vsel %vm1512, %v1509, %v1258
      %v1544 = vsel %vm1512, %v1511, %v1260
      %vm1545 = vcmask 228352
      %v1547 = vsel %vm1545, %v1514, %v1265
      %v1549 = vsel %vm1545, %v1516, %v1267
      %v1551 = vsel %vm1545, %v1518, %v1269
      %v1553 = vsel %vm1545, %v1520, %v1271
      %v1555 = vsel %vm1545, %v1522, %v1273
      %v1557 = vsel %vm1545, %v1524, %v1275
      %v1559 = vsel %vm1545, %v1526, %v1277
      %v1561 = vsel %vm1545, %v1528, %v1279
      %v1563 = vsel %vm1545, %v1530, %v1281
      %v1565 = vsel %vm1545, %v1532, %v1283
      %v1567 = vsel %vm1545, %v1534, %v1285
      %v1569 = vsel %vm1545, %v1536, %v1287
      %v1571 = vsel %vm1545, %v1538, %v1289
      %v1573 = vsel %vm1545, %v1540, %v1291
      %v1575 = vsel %vm1545, %v1542, %v1293
      %v1577 = vsel %vm1545, %v1544, %v1295
      %vm1578 = vcmask 261120
      %v1580 = vsel %vm1578, %v1547, %v1300
      %v1582 = vsel %vm1578, %v1549, %v1302
      %v1584 = vsel %vm1578, %v1551, %v1304
      %v1586 = vsel %vm1578, %v1553, %v1306
      %v1588 = vsel %vm1578, %v1555, %v1308
      %v1590 = vsel %vm1578, %v1557, %v1310
      %v1592 = vsel %vm1578, %v1559, %v1312
      %v1594 = vsel %vm1578, %v1561, %v1314
      %v1596 = vsel %vm1578, %v1563, %v1316
      %v1598 = vsel %vm1578, %v1565, %v1318
      %v1600 = vsel %vm1578, %v1567, %v1320
      %v1602 = vsel %vm1578, %v1569, %v1322
      %v1604 = vsel %vm1578, %v1571, %v1324
      %v1606 = vsel %vm1578, %v1573, %v1326
      %v1608 = vsel %vm1578, %v1575, %v1328
      %v1610 = vsel %vm1578, %v1577, %v1330
      %v1611 = vld [vmem:[%s221] sm:$0xf]
      %v1612 = vld [vmem:[%s221 + $0x4] sm:$0xf]
      %v1613 = vld [vmem:[%s221 + $0x8] sm:$0xf]
      %v1614 = vld [vmem:[%s221 + $0xc] sm:$0xf]
      %v1615 = vld [vmem:[%s227] sm:$0xff]
      %v1616 = vld [vmem:[%s227 + $0x8] sm:$0xff]
      %v1617 = vld [vmem:[%s227 + $0x10] sm:$0xff]
      %v1618 = vld [vmem:[%s227 + $0x18] sm:$0xff]
      %1620 = vset.pattern.permute.xlu0 0
      %1621 = vperm.xlu0 %1620, %v1615
      %v1622 = vpop.permute.xlu0 %1621
      %1625 = vset.pattern.permute.xlu0 0
      %1626 = vperm.xlu0 %1625, %v1616
      %v1627 = vpop.permute.xlu0 %1626
      %1630 = vset.pattern.permute.xlu0 0
      %1631 = vperm.xlu0 %1630, %v1617
      %v1632 = vpop.permute.xlu0 %1631
      %1635 = vset.pattern.permute.xlu0 0
      %1636 = vperm.xlu0 %1635, %v1618
      %v1637 = vpop.permute.xlu0 %1636
      %v1643 = vunpack.c.l.b16 %v1611
      %v1644 = vunpack.c.l.b16 %v1612
      %v1645 = vunpack.c.l.b16 %v1613
      %v1646 = vunpack.c.l.b16 %v1614
      %v1647 = vpack.c.b16 %v1644, %v1643
      %v1648 = vpack.c.b16 %v1646, %v1645
      %vm1649 = vcmask 293888
      %v1651 = vsel %vm1649, %v1647, 0
      %v1654 = vsel %vm1649, %v1648, 0
      %v1656 = vsel %vm1649, %v1580, 0
      %v1658 = vsel %vm1649, %v1582, 0
      %v1660 = vsel %vm1649, %v1584, 0
      %v1662 = vsel %vm1649, %v1586, 0
      %v1664 = vsel %vm1649, %v1588, 0
      %v1666 = vsel %vm1649, %v1590, 0
      %v1668 = vsel %vm1649, %v1592, 0
      %v1670 = vsel %vm1649, %v1594, 0
      %v1672 = vsel %vm1649, %v1596, 0
      %v1674 = vsel %vm1649, %v1598, 0
      %v1676 = vsel %vm1649, %v1600, 0
      %v1678 = vsel %vm1649, %v1602, 0
      %v1680 = vsel %vm1649, %v1604, 0
      %v1682 = vsel %vm1649, %v1606, 0
      %v1684 = vsel %vm1649, %v1608, 0
      %v1686 = vsel %vm1649, %v1610, 0
      %1688 = vmatprep.subr.bf16.mxu0 0
      %1689 = vmatpush1.bf16.xpose.msra.mxu0 %v1670
      %1690 = vmatprep.subr.bf16.mxu0 0
      %1691 = vmatpush1.bf16.xpose.msra.mxu0 %v1668
      %1692 = vmatprep.subr.bf16.mxu0 0
      %1693 = vmatpush1.bf16.xpose.msra.mxu0 %v1666
      %1694 = vmatprep.subr.bf16.mxu0 0
      %1695 = vmatpush1.bf16.xpose.msra.mxu0 %v1664
      %1696 = vmatprep.subr.bf16.mxu0 0
      %1697 = vmatpush1.bf16.xpose.msra.mxu0 %v1662
      %1698 = vmatprep.subr.bf16.mxu0 0
      %1699 = vmatpush1.bf16.xpose.msra.mxu0 %v1660
      %1700 = vmatprep.subr.bf16.mxu0 0
      %1701 = vmatpush1.bf16.xpose.msra.mxu0 %v1658
      %1702 = vmatprep.subr.bf16.mxu0 0
      %1703 = vmatpush1.bf16.xpose.msra.mxu0 %v1656
      %1704 = vmatprep.subr.bf16.mxu0 0
      %1705 = vmatpush2.bf16.xpose.msra.mxu0 %v1686
      %1706 = vmatprep.subr.bf16.mxu0 0
      %1707 = vmatpush2.bf16.xpose.msra.mxu0 %v1684
      %1708 = vmatprep.subr.bf16.mxu0 0
      %1709 = vmatpush2.bf16.xpose.msra.mxu0 %v1682
      %1710 = vmatprep.subr.bf16.mxu0 0
      %1711 = vmatpush2.bf16.xpose.msra.mxu0 %v1680
      %1712 = vmatprep.subr.bf16.mxu0 0
      %1713 = vmatpush2.bf16.xpose.msra.mxu0 %v1678
      %1714 = vmatprep.subr.bf16.mxu0 0
      %1715 = vmatpush2.bf16.xpose.msra.mxu0 %v1676
      %1716 = vmatprep.subr.bf16.mxu0 0
      %1717 = vmatpush2.bf16.xpose.msra.mxu0 %v1674
      %1718 = vmatprep.subr.bf16.mxu0 0
      %1719 = vmatpush2.bf16.xpose.msra.mxu0 %v1672
      %1720 = vmatprep.mubr.bf16.mxu0 0
      %1721 = vmatmul.mubr.bf16.gmra.mxu0 %v1651
      %v1722 = vpop.f32.mrf.mxu0
      %v1723 = vadd.f32 %v1622, %v1722
      %v1724 = vpop.f32.mrf.mxu0
      %v1725 = vadd.f32 %v1622, %v1724
      %v1726 = vpop.f32.mrf.mxu0
      %v1727 = vadd.f32 %v1627, %v1726
      %v1728 = vpop.f32.mrf.mxu0
      %v1729 = vadd.f32 %v1627, %v1728
      %1730 = vmatprep.mubr.bf16.mxu0 0
      %1731 = vmatmul.mubr.bf16.gmra.mxu0 %v1654
      %v1732 = vpop.f32.mrf.mxu0
      %v1733 = vadd.f32 %v1632, %v1732
      %v1734 = vpop.f32.mrf.mxu0
      %v1735 = vadd.f32 %v1632, %v1734
      %v1736 = vpop.f32.mrf.mxu0
      %v1737 = vadd.f32 %v1637, %v1736
      %v1738 = vpop.f32.mrf.mxu0
      %v1739 = vadd.f32 %v1637, %v1738
      %1740 = vdwg.mxu0
      %vm1741 = vcmp.gt.f32.partialorder %v1723, 0.0
      %vm1742 = vcmp.gt.f32.partialorder %v1725, 0.0
      %vm1743 = vcmp.gt.f32.partialorder %v1727, 0.0
      %vm1744 = vcmp.gt.f32.partialorder %v1729, 0.0
      %vm1745 = vcmp.gt.f32.partialorder %v1733, 0.0
      %vm1746 = vcmp.gt.f32.partialorder %v1735, 0.0
      %vm1747 = vcmp.gt.f32.partialorder %v1737, 0.0
      %vm1748 = vcmp.gt.f32.partialorder %v1739, 0.0
      %v1749 = vmul.f32 %v1723, 0.1
      %v1750 = vmul.f32 %v1725, 0.1
      %v1751 = vmul.f32 %v1727, 0.1
      %v1752 = vmul.f32 %v1729, 0.1
      %v1753 = vmul.f32 %v1733, 0.1
      %v1754 = vmul.f32 %v1735, 0.1
      %v1755 = vmul.f32 %v1737, 0.1
      %v1756 = vmul.f32 %v1739, 0.1
      %v1757 = vsel %vm1741, %v1723, %v1749
      %v1758 = vsel %vm1742, %v1725, %v1750
      %v1759 = vsel %vm1743, %v1727, %v1751
      %v1760 = vsel %vm1744, %v1729, %v1752
      %v1761 = vsel %vm1745, %v1733, %v1753
      %v1762 = vsel %vm1746, %v1735, %v1754
      %v1763 = vsel %vm1747, %v1737, %v1755
      %v1764 = vsel %vm1748, %v1739, %v1756
      %1765 = vst [vmem:[%s238] sm:$0xff] %v1757
      %1766 = vst [vmem:[%s238 + $0x8] sm:$0xff] %v1758
      %1767 = vst [vmem:[%s238 + $0x10] sm:$0xff] %v1759
      %1768 = vst [vmem:[%s238 + $0x18] sm:$0xff] %v1760
      %1769 = vst [vmem:[%s238 + $0x20] sm:$0xff] %v1761
      %1770 = vst [vmem:[%s238 + $0x28] sm:$0xff] %v1762
      %1771 = vst [vmem:[%s238 + $0x30] sm:$0xff] %v1763
      %1772 = vst [vmem:[%s238 + $0x38] sm:$0xff] %v1764
      %s1773 = smul.u32 4, %s19
      %p1774 = scmp.lt.s32.totalorder %s18, 1
      %s1775 = scalar_select %p1774, %s18, 1
      %p1776 = scmp.lt.s32.totalorder %s1773, 3
      %s1777 = scalar_select %p1776, %s1773, 3
      %s1778 = smul.addr %s1777, 2
      %s1779 = smul.addr %s1775, 8
      %s1780 = sadd.s32 %s1778, %s1779
      %s1781 = smul.addr %s1780, 8
      %s1782 = scalar_lea.vmem %s3, %s1781
      // Predicated region
      $region33: #{cbl_forward.1} parent=31 // pred_check
        %p1783 = pneg %p124
      $region34: #{cbl_forward.1} parent=31 // pred_check_branch
        %1785 = sbr.rel (%p1783) target = $region36
      $region35: #{cbl_forward.1} parent=31 // pred_region
        %s1786 = smul.u32 4, %s19
      $region36: #{cbl_forward.1} parent=31 // pred_fallthru
        _
    $region32: #{cbl_forward.1} parent=5 // pred_fallthru
      _
    %p1787 = scmp.le.s32.totalorder 2, %s9
    // Predicated region
    $region37: #{cbl_forward.1} parent=5 // pred_check
      %p1788 = pneg %p1787
    $region38: #{cbl_forward.1} parent=5 // pred_check_branch
      %1790 = sbr.rel (%p1788) target = $region40
    $region39: #{cbl_forward.1} parent=5 // pred_region
      %s1791 = ssub.s32 %s9, 2
      // Predicated region
      $region41: #{cbl_forward.1} parent=39 // pred_check
        %p1792 = pneg %p130
      $region42: #{cbl_forward.1} parent=39 // pred_check_branch
        %1794 = sbr.rel (%p1792) target = $region44
      $region43: #{cbl_forward.1} parent=39 // pred_region
        %s1795 = smul.u32 4, %s21
        %p1796 = scmp.lt.s32.totalorder %s20, 1
        %s1797 = scalar_select %p1796, %s20, 1
        %p1798 = scmp.lt.s32.totalorder %s1795, 3
        %s1799 = scalar_select %p1798, %s1795, 3
        %s1800 = smul.addr %s1799, 2
        %s1801 = smul.addr %s1797, 8
        %s1802 = sadd.s32 %s1800, %s1801
        %s1803 = smul.addr %s1802, 8
        %s1804 = scalar_lea.vmem %s3, %s1803
      $region44: #{cbl_forward.1} parent=39 // pred_fallthru
        _
    $region40: #{cbl_forward.1} parent=5 // pred_fallthru
      _
  $region6: #{cbl_forward.1} parent=0 // loop_footer
    %s13 = sadd.s32 1, %s9
  $region7: #{cbl_forward.1} parent=0 // loop_footer_branch
    %8 = sbr.rel target = $region3
  $region8: #{cbl_forward.1} parent=0 // loop_exit
    _

</llo_original>
